<compile_context>
chip_gen: v5e
topology: v5e:2x2
jax: 0.10.0
libtpu: 0.0.40
codegen_flags: <defaults>
</compile_context>

<pallas_src>
import functools
import math

import numpy as np
import jax
import jax.numpy as jnp
from jax.experimental import pallas as pl
from jax.experimental.pallas import tpu as pltpu


# ----------------------------- fused kernel ---------------------------------

def _csf_kernel(*refs, num_layers, dropout, training):
    """refs = [seed?] x_i, x_j, (w, b) * num_layers, out."""
    use_dropout = bool(training) and dropout > 0.0
    idx = 0
    if use_dropout:
        seed_ref = refs[idx]
        idx += 1
    xi_ref = refs[idx]
    xj_ref = refs[idx + 1]
    wb_refs = refs[idx + 2: idx + 2 + 2 * num_layers]
    o_ref = refs[-1]

    xi = xi_ref[...].astype(jnp.float32)          # [TM, C_in]
    xj = xj_ref[...].astype(jnp.float32)          # [TM, C_in]
    tm = xi.shape[0]

    # torch.cat([x_i, x_j], dim=0) -- stays in VMEM, never hits HBM.
    x = jnp.concatenate([xi, xj], axis=0)          # [2*TM, C_in]

    if use_dropout:
        # TODO(synk): TPU PRNG stream will not bit-match torch.nn.functional.dropout.
        pltpu.prng_seed(seed_ref[0] + pl.program_id(0))

    for l in range(num_layers):
        w = wb_refs[2 * l][...].astype(jnp.float32)        # [C_l, C_{l+1}]
        b = wb_refs[2 * l + 1][...].astype(jnp.float32)    # [1, C_{l+1}]
        x = jnp.dot(x, w, preferred_element_type=jnp.float32) + b
        if l < num_layers - 1:
            x = jnp.maximum(x, 0.0)                        # ReLU
            if use_dropout:
                bits = pltpu.bitcast(pltpu.prng_random_bits(x.shape), jnp.uint32)
                u = (bits >> 9).astype(jnp.float32) * (1.0 / float(1 << 23))
                keep = u >= jnp.float32(dropout)
                x = jnp.where(keep, x * (1.0 / (1.0 - dropout)), 0.0)

    # s = (x[:N] * x[N:]).sum(-1, keepdim=True)
    s = jnp.sum(x[:tm] * x[tm:], axis=-1, keepdims=True)    # [TM, 1]
    o_ref[...] = s.astype(o_ref.dtype)


def contrastive_scoring_forward(params, x_i, x_j, *, dropout=0.0, training=False,
                                seed=0, block_rows=None):
    """params: list of (W [in,out], b [out]) per Linear layer. Returns [N, 1] fp32."""
    n, c_in = x_i.shape
    assert x_j.shape == (n, c_in)
    num_layers = len(params)
    use_dropout = bool(training) and dropout > 0.0

    if block_rows is None:
        block_rows = n if n <= 128 else 128
    n_pad = pl.cdiv(n, block_rows) * block_rows
    if n_pad != n:
        pad = ((0, n_pad - n), (0, 0))
        x_i = jnp.pad(x_i, pad)
        x_j = jnp.pad(x_j, pad)
    grid = (n_pad // block_rows,)

    in_specs = []
    inputs = []
    if use_dropout:
        in_specs.append(pl.BlockSpec(memory_space=pltpu.MemorySpace.SMEM))
        inputs.append(jnp.asarray([seed], dtype=jnp.int32))

    # activations: tiled over the pair/row dimension
    act_spec = pl.BlockSpec((block_rows, c_in), lambda i: (i, 0))
    in_specs += [act_spec, act_spec]
    inputs += [x_i, x_j]

    # weights / biases: full blocks, resident for every grid step
    for (w, b) in params:
        k, m = w.shape
        in_specs.append(pl.BlockSpec((k, m), lambda i: (0, 0)))
        in_specs.append(pl.BlockSpec((1, m), lambda i: (0, 0)))
        inputs.append(w)
        inputs.append(b.reshape(1, m))

    out = pl.pallas_call(
        functools.partial(_csf_kernel, num_layers=num_layers,
                          dropout=float(dropout), training=bool(training)),
        out_shape=jax.ShapeDtypeStruct((n_pad, 1), jnp.float32),
        grid=grid,
        in_specs=in_specs,
        out_specs=pl.BlockSpec((block_rows, 1), lambda i: (i, 0)),
        compiler_params=pltpu.CompilerParams(
            dimension_semantics=("parallel",)),
    )(*inputs)

    return out[:n] if n_pad != n else out


# ----------------------------- pure-JAX reference ---------------------------

def csf_reference(params, x_i, x_j):
    """Eval-mode (training=False) reference of the PyTorch forward."""
    x = jnp.concatenate([x_i, x_j], axis=0)
    for (w, b) in params[:-1]:
        x = jnp.maximum(x @ w + b, 0.0)
    w, b = params[-1]
    x = x @ w + b
    n = x_i.shape[0]
    return jnp.sum(x[:n] * x[n:], axis=-1, keepdims=True)


# ----------------------------- parameter init -------------------------------

def init_linear(key, fan_in, fan_out):
    # torch.nn.Linear default init: U(-1/sqrt(fan_in), 1/sqrt(fan_in))
    kw, kb = jax.random.split(key)
    lim = 1.0 / math.sqrt(fan_in)
    w = jax.random.uniform(kw, (fan_in, fan_out), jnp.float32, -lim, lim)
    b = jax.random.uniform(kb, (fan_out,), jnp.float32, -lim, lim)
    return w, b


def init_params(key, in_channels, hidden_channels, out_channels, num_layers):
    params = []
    keys = jax.random.split(key, max(num_layers, 1))
    if num_layers == 1:
        params.append(init_linear(keys[0], in_channels, out_channels))
    else:
        params.append(init_linear(keys[0], in_channels, hidden_channels))
        for l in range(num_layers - 2):
            params.append(init_linear(keys[1 + l], hidden_channels, hidden_channels))
        params.append(init_linear(keys[num_layers - 1], hidden_channels, out_channels))
    return params


# ================================== main =====================================

if __name__ == "__main__":
    IN_CH, HID_CH, OUT_CH = 16, 32, 16
    NUM_LAYERS = 3
    DROPOUT = 0.5          # only active when training=True
    N_PAIRS = 16           # rows in x_i / x_j
    BLOCK_ROWS = 8         # -> grid=(2,), "parallel" axis usable by v7x's 2 TCs

    key = jax.random.PRNGKey(0)
    kp, ki, kj = jax.random.split(key, 3)
    params = init_params(kp, IN_CH, HID_CH, OUT_CH, NUM_LAYERS)
    x_i = jax.random.normal(ki, (N_PAIRS, IN_CH), jnp.float32)
    x_j = jax.random.normal(kj, (N_PAIRS, IN_CH), jnp.float32)

    fwd = jax.jit(functools.partial(contrastive_scoring_forward,
                                    dropout=DROPOUT, training=False,
                                    block_rows=BLOCK_ROWS))
    s = fwd(params, x_i, x_j)
    jax.block_until_ready(s)
    assert s.shape == (N_PAIRS, 1)

    s_ref = csf_reference(params, x_i, x_j)
    np.testing.assert_allclose(np.asarray(s), np.asarray(s_ref),
                               rtol=1e-4, atol=1e-4)

    print("KERNEL_OK")
</pallas_src>

<mosaic_0001>
module attributes {stable_mosaic.version = 11 : i64} {
  func.func @_csf_kernel(%arg0: i32, %arg1: memref<8x16xf32, #tpu.memory_space<vmem>>, %arg2: memref<8x16xf32, #tpu.memory_space<vmem>>, %arg3: memref<16x32xf32, #tpu.memory_space<vmem>>, %arg4: memref<1x32xf32, #tpu.memory_space<vmem>>, %arg5: memref<32x32xf32, #tpu.memory_space<vmem>>, %arg6: memref<1x32xf32, #tpu.memory_space<vmem>>, %arg7: memref<32x16xf32, #tpu.memory_space<vmem>>, %arg8: memref<1x16xf32, #tpu.memory_space<vmem>>, %arg9: memref<8x1xf32, #tpu.memory_space<vmem>>) attributes {dimension_semantics = [#tpu.dimension_semantics<parallel>], iteration_bounds = array<i64: 2>, scalar_prefetch = 0 : i64, scratch_operands = 0 : i64, tpu.core_type = #tpu.core_type<tc>, window_params = [{transform_indices = @transform_0, window_bounds = array<i64: 8, 16>}, {transform_indices = @transform_1, window_bounds = array<i64: 8, 16>}, {pipeline_mode = #tpu.pipeline_mode<synchronous>, transform_indices = @transform_2, window_bounds = array<i64: 16, 32>}, {pipeline_mode = #tpu.pipeline_mode<synchronous>, transform_indices = @transform_3, window_bounds = array<i64: 1, 32>}, {pipeline_mode = #tpu.pipeline_mode<synchronous>, transform_indices = @transform_4, window_bounds = array<i64: 32, 32>}, {pipeline_mode = #tpu.pipeline_mode<synchronous>, transform_indices = @transform_5, window_bounds = array<i64: 1, 32>}, {pipeline_mode = #tpu.pipeline_mode<synchronous>, transform_indices = @transform_6, window_bounds = array<i64: 32, 16>}, {pipeline_mode = #tpu.pipeline_mode<synchronous>, transform_indices = @transform_7, window_bounds = array<i64: 1, 16>}, {transform_indices = @transform_8, window_bounds = array<i64: 8, 1>}]} {
    %c0 = arith.constant 0 : index
    %c0_0 = arith.constant 0 : index
    %0 = vector.load %arg1[%c0, %c0_0] : memref<8x16xf32, #tpu.memory_space<vmem>>, vector<8x16xf32>
    %c0_1 = arith.constant 0 : index
    %c0_2 = arith.constant 0 : index
    %1 = vector.load %arg2[%c0_1, %c0_2] : memref<8x16xf32, #tpu.memory_space<vmem>>, vector<8x16xf32>
    %2 = tpu.concatenate %0, %1 in 0 : vector<8x16xf32>, vector<8x16xf32> -> vector<16x16xf32>
    %c0_3 = arith.constant 0 : index
    %c0_4 = arith.constant 0 : index
    %3 = vector.load %arg3[%c0_3, %c0_4] : memref<16x32xf32, #tpu.memory_space<vmem>>, vector<16x32xf32>
    %c0_5 = arith.constant 0 : index
    %c0_6 = arith.constant 0 : index
    %4 = vector.load %arg4[%c0_5, %c0_6] : memref<1x32xf32, #tpu.memory_space<vmem>>, vector<1x32xf32>
    %cst = arith.constant dense<0.000000e+00> : vector<16x32xf32>
    %5 = tpu.matmul %2, %3, %cst {dimension_numbers = #tpu.dot_dimension_numbers<[1], [0], [0], [1], [0, 0, 1, 1], [], []>} : vector<16x16xf32>, vector<16x32xf32>, vector<16x32xf32> -> vector<16x32xf32>
    %6 = vector.broadcast %4 : vector<1x32xf32> to vector<16x32xf32>
    %7 = arith.addf %5, %6 : vector<16x32xf32>
    %cst_7 = arith.constant 0.000000e+00 : f32
    %8 = vector.broadcast %cst_7 : f32 to vector<16x32xf32>
    %9 = arith.maximumf %7, %8 : vector<16x32xf32>
    %c0_8 = arith.constant 0 : index
    %c0_9 = arith.constant 0 : index
    %10 = vector.load %arg5[%c0_8, %c0_9] : memref<32x32xf32, #tpu.memory_space<vmem>>, vector<32x32xf32>
    %c0_10 = arith.constant 0 : index
    %c0_11 = arith.constant 0 : index
    %11 = vector.load %arg6[%c0_10, %c0_11] : memref<1x32xf32, #tpu.memory_space<vmem>>, vector<1x32xf32>
    %cst_12 = arith.constant dense<0.000000e+00> : vector<16x32xf32>
    %12 = tpu.matmul %9, %10, %cst_12 {dimension_numbers = #tpu.dot_dimension_numbers<[1], [0], [0], [1], [0, 0, 1, 1], [], []>} : vector<16x32xf32>, vector<32x32xf32>, vector<16x32xf32> -> vector<16x32xf32>
    %13 = vector.broadcast %11 : vector<1x32xf32> to vector<16x32xf32>
    %14 = arith.addf %12, %13 : vector<16x32xf32>
    %cst_13 = arith.constant 0.000000e+00 : f32
    %15 = vector.broadcast %cst_13 : f32 to vector<16x32xf32>
    %16 = arith.maximumf %14, %15 : vector<16x32xf32>
    %c0_14 = arith.constant 0 : index
    %c0_15 = arith.constant 0 : index
    %17 = vector.load %arg7[%c0_14, %c0_15] : memref<32x16xf32, #tpu.memory_space<vmem>>, vector<32x16xf32>
    %c0_16 = arith.constant 0 : index
    %c0_17 = arith.constant 0 : index
    %18 = vector.load %arg8[%c0_16, %c0_17] : memref<1x16xf32, #tpu.memory_space<vmem>>, vector<1x16xf32>
    %cst_18 = arith.constant dense<0.000000e+00> : vector<16x16xf32>
    %19 = tpu.matmul %16, %17, %cst_18 {dimension_numbers = #tpu.dot_dimension_numbers<[1], [0], [0], [1], [0, 0, 1, 1], [], []>} : vector<16x32xf32>, vector<32x16xf32>, vector<16x16xf32> -> vector<16x16xf32>
    %20 = vector.broadcast %18 : vector<1x16xf32> to vector<16x16xf32>
    %21 = arith.addf %19, %20 : vector<16x16xf32>
    %22 = vector.extract_strided_slice %21 {offsets = [0, 0], sizes = [8, 16], strides = [1, 1]} : vector<16x16xf32> to vector<8x16xf32>
    %23 = vector.extract_strided_slice %21 {offsets = [8, 0], sizes = [8, 16], strides = [1, 1]} : vector<16x16xf32> to vector<8x16xf32>
    %24 = arith.mulf %22, %23 : vector<8x16xf32>
    %cst_19 = arith.constant dense<0.000000e+00> : vector<8xf32>
    %25 = vector.multi_reduction <add>, %24, %cst_19 [1] : vector<8x16xf32> to vector<8xf32>
    %26 = vector.shape_cast %25 : vector<8xf32> to vector<8x1xf32>
    %c0_20 = arith.constant 0 : index
    %c0_21 = arith.constant 0 : index
    %27 = vector.load %arg9[%c0_20, %c0_21] : memref<8x1xf32, #tpu.memory_space<vmem>>, vector<8x1xf32>
    tpu.vector_store %arg9[%c0_20, %c0_21], %26 {strides = array<i32>} : memref<8x1xf32, #tpu.memory_space<vmem>>, vector<8x1xf32>,
    return
  }
  func.func @transform_0(%arg0: i32) -> (i32, i32) {
    %c0_i32 = arith.constant 0 : i32
    %c0_i32_0 = arith.constant 0 : i32
    return %arg0, %c0_i32 : i32, i32
  }
  func.func @transform_1(%arg0: i32) -> (i32, i32) {
    %c0_i32 = arith.constant 0 : i32
    %c0_i32_0 = arith.constant 0 : i32
    return %arg0, %c0_i32 : i32, i32
  }
  func.func @transform_2(%arg0: i32) -> (i32, i32) {
    %c0_i32 = arith.constant 0 : i32
    %c0_i32_0 = arith.constant 0 : i32
    %c0_i32_1 = arith.constant 0 : i32
    return %c0_i32, %c0_i32_0 : i32, i32
  }
  func.func @transform_3(%arg0: i32) -> (i32, i32) {
    %c0_i32 = arith.constant 0 : i32
    %c0_i32_0 = arith.constant 0 : i32
    %c0_i32_1 = arith.constant 0 : i32
    return %c0_i32, %c0_i32_0 : i32, i32
  }
  func.func @transform_4(%arg0: i32) -> (i32, i32) {
    %c0_i32 = arith.constant 0 : i32
    %c0_i32_0 = arith.constant 0 : i32
    %c0_i32_1 = arith.constant 0 : i32
    return %c0_i32, %c0_i32_0 : i32, i32
  }
  func.func @transform_5(%arg0: i32) -> (i32, i32) {
    %c0_i32 = arith.constant 0 : i32
    %c0_i32_0 = arith.constant 0 : i32
    %c0_i32_1 = arith.constant 0 : i32
    return %c0_i32, %c0_i32_0 : i32, i32
  }
  func.func @transform_6(%arg0: i32) -> (i32, i32) {
    %c0_i32 = arith.constant 0 : i32
    %c0_i32_0 = arith.constant 0 : i32
    %c0_i32_1 = arith.constant 0 : i32
    return %c0_i32, %c0_i32_0 : i32, i32
  }
  func.func @transform_7(%arg0: i32) -> (i32, i32) {
    %c0_i32 = arith.constant 0 : i32
    %c0_i32_0 = arith.constant 0 : i32
    %c0_i32_1 = arith.constant 0 : i32
    return %c0_i32, %c0_i32_0 : i32, i32
  }
  func.func @transform_8(%arg0: i32) -> (i32, i32) {
    %c0_i32 = arith.constant 0 : i32
    %c0_i32_0 = arith.constant 0 : i32
    return %arg0, %c0_i32 : i32, i32
  }
}

</mosaic_0001>

<llo_original>
// kernel: contrastive_scoring_forward.1
$region0: #{contrastive_scoring_forward.1}
  #allocation0 [shape = 'u32[]', space=smem, size = 0x4, offset = 0x4, fixed_abs, tag = 'smem constant byte address 0x4 - core index']
  #allocation1 [shape = 'u32[72,128]{1,0:T(1,128)}', space=vmem, size = 0x9000, scoped, tag = 'internal scratch']
  %s0 = inlined_call_operand.vmem [shape: f32[16,16], index: 0, kind: input, shape index: {}]
  %s1 = inlined_call_operand.hbm [shape: f32[16,16], index: 1, kind: input, shape index: {}]
  %s2 = inlined_call_operand.hbm [shape: f32[16,32], index: 2, kind: input, shape index: {}]
  %s3 = inlined_call_operand.vmem [shape: f32[1,32], index: 3, kind: input, shape index: {}]
  %s4 = inlined_call_operand.vmem [shape: f32[32,32], index: 4, kind: input, shape index: {}]
  %s5 = inlined_call_operand.vmem [shape: f32[1,32], index: 5, kind: input, shape index: {}]
  %s6 = inlined_call_operand.vmem [shape: f32[32,16], index: 6, kind: input, shape index: {}]
  %s7 = inlined_call_operand.vmem [shape: f32[1,16], index: 7, kind: input, shape index: {}]
  %s8 = inlined_call_operand.vmem [shape: f32[16,1], index: 8, kind: output, shape index: {}]
  %s9 = sld [smem:[#allocation0]]
  $region73: #{contrastive_scoring_forward.1} parent=0
    _
  %s11 = ssub.s32 1, %s9
  %s12 = scalar_select 0, %s11, %s9
  $region1: #{contrastive_scoring_forward.1} parent=0
    #allocation2 [shape = 'u8[8192]{0}', space=vmem, size = 0x2000, scoped, tag = 'input window, operand 1']
    #allocation3 [shape = 's32[2]{0}', space=sflag, size = 0x8, scoped, tag = 'scoped memory for contrastive_scoring_forward.1']
    #allocation4 [shape = 'u8[8192]{0}', space=vmem, size = 0x2000, scoped, tag = 'input window, operand 2, single buffered']
    #allocation5 [shape = 's32[1]{0}', space=sflag, size = 0x4, scoped, tag = 'scoped memory for contrastive_scoring_forward.1']
    %13 = vsyncpa [#allocation3], 0
    %s14 = scalar_lea.sflag [#allocation3], 1
    %15 = vsyncpa %s14, 0
    %16 = vsyncpa [#allocation5], 0
    loop: start=0, step=1, limit=4
    $region2: #{contrastive_scoring_forward.1} parent=1 // loop_pre_header
      _
    $region3: #{contrastive_scoring_forward.1} parent=1 // loop_header
      %s18 = sphi 0, %s22
      %p19 = scmp.ge.s32.totalorder %s18, 4
      %s28 = sphi 0, %s30
      %s31 = sphi 0, %s28
      %s32 = sphi 0, %s31
      %s48 = sphi 0, %s32
      %s54 = sphi 0, %s56
      %s57 = sphi 0, %s54
      %s58 = sphi 0, %s57
      %s74 = sphi 0, %s58
      %s78 = sphi 0, %s78
      %s80 = sphi 0, %s78
      %s81 = sphi 0, %s80
      %s95 = sphi 0, %s81
      %s99 = sphi 0, %s99
      %s101 = sphi 0, %s99
      %s102 = sphi 0, %s101
      %s116 = sphi 0, %s102
      %s120 = sphi 0, %s120
      %s122 = sphi 0, %s120
      %s123 = sphi 0, %s122
      %s137 = sphi 0, %s123
      %s141 = sphi 0, %s141
      %s143 = sphi 0, %s141
      %s144 = sphi 0, %s143
      %s158 = sphi 0, %s144
      %s162 = sphi 0, %s162
      %s164 = sphi 0, %s162
      %s165 = sphi 0, %s164
      %s179 = sphi 0, %s165
      %s183 = sphi 0, %s183
      %s185 = sphi 0, %s183
      %s186 = sphi 0, %s185
      %s200 = sphi 0, %s186
      %s206 = sphi 0, %s208
      %s209 = sphi 0, %s206
      %s210 = sphi 0, %s209
      %s226 = sphi 0, %s210
    $region4: #{contrastive_scoring_forward.1} parent=1 // loop_header_branch
      %21 = sbr.rel (%p19) target = $region8
    $region5: #{contrastive_scoring_forward.1} parent=1 // loop_body
      %s23 = ssub.s32 %s18, 1
      %s24 = ssub.s32 %s18, 2
      %s25 = sadd.s32 %s18, 1
      %s26 = ssub.s32 %s18, %s25
      %p27 = scmp.eq.s32.totalorder %s26, 0
      %s29 = sadd.s32 %s28, 1
      %s30 = scalar_select %p27, %s28, %s29
      %p33 = pneg %p27
      %p34 = scmp.eq.s32.totalorder %s18, 1
      %p35 = por %p33, %p34
      %p36 = scmp.ne.s32.totalorder %s28, %s31
      %p37 = scmp.eq.s32.totalorder %s18, 0
      %p38 = por %p36, %p37
      %p39 = scmp.ne.s32.totalorder %s28, %s31
      %p40 = scmp.eq.s32.totalorder %s23, 1
      %p41 = por %p39, %p40
      %p42 = scmp.ne.s32.totalorder %s31, %s32
      %p43 = scmp.eq.s32.totalorder %s23, 0
      %p44 = por %p42, %p43
      %p45 = scmp.ne.s32.totalorder %s31, %s32
      %p46 = scmp.eq.s32.totalorder %s24, 1
      %p47 = por %p45, %p46
      %p49 = scmp.ne.s32.totalorder %s32, %s48
      %p50 = scmp.eq.s32.totalorder %s24, 0
      %p51 = por %p49, %p50
      %s52 = ssub.s32 %s18, %s25
      %p53 = scmp.eq.s32.totalorder %s52, 0
      %s55 = sadd.s32 %s54, 1
      %s56 = scalar_select %p53, %s54, %s55
      %p59 = pneg %p53
      %p60 = scmp.eq.s32.totalorder %s18, 1
      %p61 = por %p59, %p60
      %p62 = scmp.ne.s32.totalorder %s54, %s57
      %p63 = scmp.eq.s32.totalorder %s18, 0
      %p64 = por %p62, %p63
      %p65 = scmp.ne.s32.totalorder %s54, %s57
      %p66 = scmp.eq.s32.totalorder %s23, 1
      %p67 = por %p65, %p66
      %p68 = scmp.ne.s32.totalorder %s57, %s58
      %p69 = scmp.eq.s32.totalorder %s23, 0
      %p70 = por %p68, %p69
      %p71 = scmp.ne.s32.totalorder %s57, %s58
      %p72 = scmp.eq.s32.totalorder %s24, 1
      %p73 = por %p71, %p72
      %p75 = scmp.ne.s32.totalorder %s58, %s74
      %p76 = scmp.eq.s32.totalorder %s24, 0
      %p77 = por %p75, %p76
      %s79 = sadd.s32 %s78, 1
      %p82 = scmp.eq.s32.totalorder %s18, 1
      %p83 = scmp.ne.s32.totalorder %s78, %s80
      %p84 = scmp.eq.s32.totalorder %s18, 0
      %p85 = por %p83, %p84
      %p86 = scmp.ne.s32.totalorder %s78, %s80
      %p87 = scmp.eq.s32.totalorder %s23, 1
      %p88 = por %p86, %p87
      %p89 = scmp.ne.s32.totalorder %s80, %s81
      %p90 = scmp.eq.s32.totalorder %s23, 0
      %p91 = por %p89, %p90
      %p92 = scmp.ne.s32.totalorder %s80, %s81
      %p93 = scmp.eq.s32.totalorder %s24, 1
      %p94 = por %p92, %p93
      %p96 = scmp.ne.s32.totalorder %s81, %s95
      %p97 = scmp.eq.s32.totalorder %s24, 0
      %p98 = por %p96, %p97
      %s100 = sadd.s32 %s99, 1
      %p103 = scmp.eq.s32.totalorder %s18, 1
      %p104 = scmp.ne.s32.totalorder %s99, %s101
      %p105 = scmp.eq.s32.totalorder %s18, 0
      %p106 = por %p104, %p105
      %p107 = scmp.ne.s32.totalorder %s99, %s101
      %p108 = scmp.eq.s32.totalorder %s23, 1
      %p109 = por %p107, %p108
      %p110 = scmp.ne.s32.totalorder %s101, %s102
      %p111 = scmp.eq.s32.totalorder %s23, 0
      %p112 = por %p110, %p111
      %p113 = scmp.ne.s32.totalorder %s101, %s102
      %p114 = scmp.eq.s32.totalorder %s24, 1
      %p115 = por %p113, %p114
      %p117 = scmp.ne.s32.totalorder %s102, %s116
      %p118 = scmp.eq.s32.totalorder %s24, 0
      %p119 = por %p117, %p118
      %s121 = sadd.s32 %s120, 1
      %p124 = scmp.eq.s32.totalorder %s18, 1
      %p125 = scmp.ne.s32.totalorder %s120, %s122
      %p126 = scmp.eq.s32.totalorder %s18, 0
      %p127 = por %p125, %p126
      %p128 = scmp.ne.s32.totalorder %s120, %s122
      %p129 = scmp.eq.s32.totalorder %s23, 1
      %p130 = por %p128, %p129
      %p131 = scmp.ne.s32.totalorder %s122, %s123
      %p132 = scmp.eq.s32.totalorder %s23, 0
      %p133 = por %p131, %p132
      %p134 = scmp.ne.s32.totalorder %s122, %s123
      %p135 = scmp.eq.s32.totalorder %s24, 1
      %p136 = por %p134, %p135
      %p138 = scmp.ne.s32.totalorder %s123, %s137
      %p139 = scmp.eq.s32.totalorder %s24, 0
      %p140 = por %p138, %p139
      %s142 = sadd.s32 %s141, 1
      %p145 = scmp.eq.s32.totalorder %s18, 1
      %p146 = scmp.ne.s32.totalorder %s141, %s143
      %p147 = scmp.eq.s32.totalorder %s18, 0
      %p148 = por %p146, %p147
      %p149 = scmp.ne.s32.totalorder %s141, %s143
      %p150 = scmp.eq.s32.totalorder %s23, 1
      %p151 = por %p149, %p150
      %p152 = scmp.ne.s32.totalorder %s143, %s144
      %p153 = scmp.eq.s32.totalorder %s23, 0
      %p154 = por %p152, %p153
      %p155 = scmp.ne.s32.totalorder %s143, %s144
      %p156 = scmp.eq.s32.totalorder %s24, 1
      %p157 = por %p155, %p156
      %p159 = scmp.ne.s32.totalorder %s144, %s158
      %p160 = scmp.eq.s32.totalorder %s24, 0
      %p161 = por %p159, %p160
      %s163 = sadd.s32 %s162, 1
      %p166 = scmp.eq.s32.totalorder %s18, 1
      %p167 = scmp.ne.s32.totalorder %s162, %s164
      %p168 = scmp.eq.s32.totalorder %s18, 0
      %p169 = por %p167, %p168
      %p170 = scmp.ne.s32.totalorder %s162, %s164
      %p171 = scmp.eq.s32.totalorder %s23, 1
      %p172 = por %p170, %p171
      %p173 = scmp.ne.s32.totalorder %s164, %s165
      %p174 = scmp.eq.s32.totalorder %s23, 0
      %p175 = por %p173, %p174
      %p176 = scmp.ne.s32.totalorder %s164, %s165
      %p177 = scmp.eq.s32.totalorder %s24, 1
      %p178 = por %p176, %p177
      %p180 = scmp.ne.s32.totalorder %s165, %s179
      %p181 = scmp.eq.s32.totalorder %s24, 0
      %p182 = por %p180, %p181
      %s184 = sadd.s32 %s183, 1
      %p187 = scmp.eq.s32.totalorder %s18, 1
      %p188 = scmp.ne.s32.totalorder %s183, %s185
      %p189 = scmp.eq.s32.totalorder %s18, 0
      %p190 = por %p188, %p189
      %p191 = scmp.ne.s32.totalorder %s183, %s185
      %p192 = scmp.eq.s32.totalorder %s23, 1
      %p193 = por %p191, %p192
      %p194 = scmp.ne.s32.totalorder %s185, %s186
      %p195 = scmp.eq.s32.totalorder %s23, 0
      %p196 = por %p194, %p195
      %p197 = scmp.ne.s32.totalorder %s185, %s186
      %p198 = scmp.eq.s32.totalorder %s24, 1
      %p199 = por %p197, %p198
      %p201 = scmp.ne.s32.totalorder %s186, %s200
      %p202 = scmp.eq.s32.totalorder %s24, 0
      %p203 = por %p201, %p202
      %s204 = ssub.s32 %s18, %s25
      %p205 = scmp.eq.s32.totalorder %s204, 0
      %s207 = sadd.s32 %s206, 1
      %s208 = scalar_select %p205, %s206, %s207
      %p211 = pneg %p205
      %p212 = scmp.eq.s32.totalorder %s18, 1
      %p213 = por %p211, %p212
      %p214 = scmp.ne.s32.totalorder %s206, %s209
      %p215 = scmp.eq.s32.totalorder %s18, 0
      %p216 = por %p214, %p215
      %p217 = scmp.ne.s32.totalorder %s206, %s209
      %p218 = scmp.eq.s32.totalorder %s23, 1
      %p219 = por %p217, %p218
      %p220 = scmp.ne.s32.totalorder %s209, %s210
      %p221 = scmp.eq.s32.totalorder %s23, 0
      %p222 = por %p220, %p221
      %p223 = scmp.ne.s32.totalorder %s209, %s210
      %p224 = scmp.eq.s32.totalorder %s24, 1
      %p225 = por %p223, %p224
      %p227 = scmp.ne.s32.totalorder %s210, %s226
      %p228 = scmp.eq.s32.totalorder %s24, 0
      %p229 = por %p227, %p228
      %p230 = scmp.le.s32.totalorder 1, %s18
      %p231 = scmp.lt.s32.totalorder %s18, 3
      %p232 = pnand %p230, %p231
      %p233 = pneg %p232
      // Predicated region
      $region9: #{contrastive_scoring_forward.1} parent=5 // pred_check
        _
      $region10: #{contrastive_scoring_forward.1} parent=5 // pred_check_branch
        %235 = sbr.rel (%p232) target = $region12
      $region11: #{contrastive_scoring_forward.1} parent=5 // pred_region
        %s236 = ssub.s32 %s18, 1
        // Predicated region
        $region13: #{contrastive_scoring_forward.1} parent=11 // pred_check
          %p237 = pneg %p91
        $region14: #{contrastive_scoring_forward.1} parent=11 // pred_check_branch
          %239 = sbr.rel (%p237) target = $region16
        $region15: #{contrastive_scoring_forward.1} parent=11 // pred_region
          %241 = vsyncadd [#allocation5], 0
          %s242 = sshll.u32 %s2, 4
          %s243 = int_to_ptr.hbm [resolvable:$true] %s242
          %s244 = sshll.u32 [#allocation4], 4
          %s245 = int_to_ptr.vmem [resolvable:$true] %s244
          %250 = dma.hbm_to_vmem [thread:$0]  %s243, 256, %s245, [#allocation5], 128, 128, 8
        $region16: #{contrastive_scoring_forward.1} parent=11 // pred_fallthru
          _
        // Predicated region
        $region17: #{contrastive_scoring_forward.1} parent=11 // pred_check
          %p251 = pneg %p112
        $region18: #{contrastive_scoring_forward.1} parent=11 // pred_check_branch
          %253 = sbr.rel (%p251) target = $region20
        $region19: #{contrastive_scoring_forward.1} parent=11 // pred_region
          _
        $region20: #{contrastive_scoring_forward.1} parent=11 // pred_fallthru
          _
        // Predicated region
        $region21: #{contrastive_scoring_forward.1} parent=11 // pred_check
          %p254 = pneg %p133
        $region22: #{contrastive_scoring_forward.1} parent=11 // pred_check_branch
          %256 = sbr.rel (%p254) target = $region24
        $region23: #{contrastive_scoring_forward.1} parent=11 // pred_region
          _
        $region24: #{contrastive_scoring_forward.1} parent=11 // pred_fallthru
          _
        // Predicated region
        $region25: #{contrastive_scoring_forward.1} parent=11 // pred_check
          %p257 = pneg %p154
        $region26: #{contrastive_scoring_forward.1} parent=11 // pred_check_branch
          %259 = sbr.rel (%p257) target = $region28
        $region27: #{contrastive_scoring_forward.1} parent=11 // pred_region
          _
        $region28: #{contrastive_scoring_forward.1} parent=11 // pred_fallthru
          _
        // Predicated region
        $region29: #{contrastive_scoring_forward.1} parent=11 // pred_check
          %p260 = pneg %p175
        $region30: #{contrastive_scoring_forward.1} parent=11 // pred_check_branch
          %262 = sbr.rel (%p260) target = $region32
        $region31: #{contrastive_scoring_forward.1} parent=11 // pred_region
          _
        $region32: #{contrastive_scoring_forward.1} parent=11 // pred_fallthru
          _
        // Predicated region
        $region33: #{contrastive_scoring_forward.1} parent=11 // pred_check
          %p263 = pneg %p196
        $region34: #{contrastive_scoring_forward.1} parent=11 // pred_check_branch
          %265 = sbr.rel (%p263) target = $region36
        $region35: #{contrastive_scoring_forward.1} parent=11 // pred_region
          _
        $region36: #{contrastive_scoring_forward.1} parent=11 // pred_fallthru
          _
      $region12: #{contrastive_scoring_forward.1} parent=5 // pred_fallthru
        _
      %p266 = scmp.lt.s32.totalorder %s18, 2
      // Predicated region
      $region37: #{contrastive_scoring_forward.1} parent=5 // pred_check
        %p267 = pneg %p266
      $region38: #{contrastive_scoring_forward.1} parent=5 // pred_check_branch
        %269 = sbr.rel (%p267) target = $region40
      $region39: #{contrastive_scoring_forward.1} parent=5 // pred_region
        // Predicated region
        $region41: #{contrastive_scoring_forward.1} parent=39 // pred_check
          %p270 = pneg %p38
        $region42: #{contrastive_scoring_forward.1} parent=39 // pred_check_branch
          %272 = sbr.rel (%p270) target = $region44
        $region43: #{contrastive_scoring_forward.1} parent=39 // pred_region
          %p273 = scmp.lt.s32.totalorder %s18, 1
          %s274 = scalar_select %p273, %s18, 1
          %s275 = smul.addr %s274, 8
          %s276 = scalar_lea.vmem %s0, %s275
        $region44: #{contrastive_scoring_forward.1} parent=39 // pred_fallthru
          _
        // Predicated region
        $region45: #{contrastive_scoring_forward.1} parent=39 // pred_check
          %p277 = pneg %p64
        $region46: #{contrastive_scoring_forward.1} parent=39 // pred_check_branch
          %279 = sbr.rel (%p277) target = $region48
        $region47: #{contrastive_scoring_forward.1} parent=39 // pred_region
          %s280 = sand.u32 %s54, 1
          %s281 = scalar_lea.sflag [#allocation3], %s280
          %s282 = sand.u32 %s54, 1
          %s283 = smul.addr %s282, 8
          %s284 = scalar_lea.vmem [#allocation2], %s283
          %286 = vsyncadd %s281, 0
          %s287 = smul.addr %s18, 8
          %s288 = scalar_lea.hbm %s1, %s287
          %s290 = sshll.u32 %s288, 4
          %s291 = int_to_ptr.hbm [resolvable:$true] %s290
          %s292 = sshll.u32 %s284, 4
          %s293 = int_to_ptr.vmem [resolvable:$true] %s292
          %295 = dma.hbm_to_vmem [thread:$0]  %s291, 128, %s293, %s281
        $region48: #{contrastive_scoring_forward.1} parent=39 // pred_fallthru
          _
      $region40: #{contrastive_scoring_forward.1} parent=5 // pred_fallthru
        _
      %p296 = scmp.le.s32.totalorder 1, %s18
      %p297 = scmp.lt.s32.totalorder %s18, 3
      %p298 = pnand %p296, %p297
      %p299 = pneg %p298
      // Predicated region
      $region49: #{contrastive_scoring_forward.1} parent=5 // pred_check
        _
      $region50: #{contrastive_scoring_forward.1} parent=5 // pred_check_branch
        %301 = sbr.rel (%p298) target = $region52
      $region51: #{contrastive_scoring_forward.1} parent=5 // pred_region
        %s302 = ssub.s32 %s18, 1
        %s303 = sand.u32 %s57, 1
        %s304 = scalar_lea.sflag [#allocation3], %s303
        %s305 = sand.u32 %s57, 1
        %s306 = smul.addr %s305, 8
        %s307 = scalar_lea.vmem [#allocation2], %s306
        // Predicated region
        $region53: #{contrastive_scoring_forward.1} parent=51 // pred_check
          %p308 = pneg %p70
        $region54: #{contrastive_scoring_forward.1} parent=51 // pred_check_branch
          %310 = sbr.rel (%p308) target = $region56
        $region55: #{contrastive_scoring_forward.1} parent=51 // pred_region
          %312 = dma.done %s304, 128
        $region56: #{contrastive_scoring_forward.1} parent=51 // pred_fallthru
          _
        // Predicated region
        $region57: #{contrastive_scoring_forward.1} parent=51 // pred_check
          %p313 = pneg %p91
        $region58: #{contrastive_scoring_forward.1} parent=51 // pred_check_branch
          %315 = sbr.rel (%p313) target = $region60
        $region59: #{contrastive_scoring_forward.1} parent=51 // pred_region
          %317 = dma.done [#allocation5], 256
        $region60: #{contrastive_scoring_forward.1} parent=51 // pred_fallthru
          _
        %p318 = scmp.lt.s32.totalorder %s23, 1
        %s319 = scalar_select %p318, %s23, 1
        %s320 = smul.addr %s319, 8
        %s321 = scalar_lea.vmem %s0, %s320
        %p322 = pneg %p44
        %p323 = pneg %p41
        %s324 = sand.u32 %s57, 1
        %s325 = scalar_lea.sflag [#allocation3], %s324
        %s326 = sand.u32 %s57, 1
        %s327 = smul.addr %s326, 8
        %s328 = scalar_lea.vmem [#allocation2], %s327
        %p329 = pneg %p70
        %p330 = pneg %p67
        %p331 = pneg %p91
        %p332 = pneg %p88
        %p333 = pneg %p112
        %p334 = pneg %p109
        %p335 = pneg %p133
        %p336 = pneg %p130
        %p337 = pneg %p154
        %p338 = pneg %p151
        %p339 = pneg %p175
        %p340 = pneg %p172
        %p341 = pneg %p196
        %p342 = pneg %p193
        %p343 = pneg %p222
        %p344 = pneg %p219
        %p345 = scmp.lt.s32.totalorder %s23, 1
        %s346 = scalar_select %p345, %s23, 1
        %s347 = smul.addr %s346, 8
        %s348 = scalar_lea.vmem %s8, %s347
        %p349 = scmp.lt.s32.totalorder %s23, 1
        %s350 = scalar_select %p349, %s23, 1
        %s351 = smul.addr %s350, 8
        %s352 = scalar_lea.vmem %s0, %s351
        %p353 = scmp.lt.s32.totalorder %s23, 1
        %s354 = scalar_select %p353, %s23, 1
        %s355 = smul.addr %s354, 8
        %s356 = scalar_lea.vmem %s8, %s355
        %v357 = vld [vmem:[%s352] sm:$0xff]
        %v358 = vld [vmem:[%s307] sm:$0xff]
        %v359 = vld [vmem:[#allocation4] sm:$0xff]
        %v360 = vld [vmem:[#allocation4 + $0x8] sm:$0xff]
        %v361 = vld [vmem:[%s3] sm:$0x1]
        %v363 = vperm.slane %v361, 0
        %vm365 = vcmask 130048
        %v367 = vsel %vm365, %v357, 0
        %v370 = vsel %vm365, %v358, 0
        %372 = vmatpush.msra.mxu0 0.0
        %373 = vmatpush.msra.mxu0 0.0
        %374 = vmatpush.msra.mxu0 0.0
        %375 = vmatpush.msra.mxu0 0.0
        %376 = vmatpush.msra.mxu0 0.0
        %377 = vmatpush.msra.mxu0 0.0
        %378 = vmatpush.msra.mxu0 0.0
        %379 = vmatpush.msra.mxu0 0.0
        %380 = vmatpush.msra.mxu0 0.0
        %381 = vmatpush.msra.mxu0 0.0
        %382 = vmatpush.msra.mxu0 0.0
        %383 = vmatpush.msra.mxu0 0.0
        %384 = vmatpush.msra.mxu0 0.0
        %385 = vmatpush.msra.mxu0 0.0
        %386 = vmatpush.msra.mxu0 %v360
        %387 = vmatpush.msra.mxu0 %v359
        %388 = vmatmul.f32.gmra.mxu0 %v367
        %v389 = vpop.f32.mrf.mxu0
        %v390 = vadd.f32 %v363, %v389
        %391 = vmatmul.f32.gmra.mxu0 %v370
        %v392 = vpop.f32.mrf.mxu0
        %v393 = vadd.f32 %v363, %v392
        %394 = vdwg.mxu0
        %v395 = vmax.f32 %v390, 0.0
        %v396 = vmax.f32 %v393, 0.0
        %v397 = vld [vmem:[%s4] sm:$0xff]
        %v398 = vld [vmem:[%s4 + $0x8] sm:$0xff]
        %v399 = vld [vmem:[%s4 + $0x10] sm:$0xff]
        %v400 = vld [vmem:[%s4 + $0x18] sm:$0xff]
        %v401 = vld [vmem:[%s5] sm:$0x1]
        %v403 = vperm.slane %v401, 0
        %vm405 = vcmask 261120
        %v407 = vsel %vm405, %v395, 0
        %v410 = vsel %vm405, %v396, 0
        %412 = vmatpush.msra.mxu0 0.0
        %413 = vmatpush.msra.mxu0 0.0
        %414 = vmatpush.msra.mxu0 0.0
        %415 = vmatpush.msra.mxu0 0.0
        %416 = vmatpush.msra.mxu0 0.0
        %417 = vmatpush.msra.mxu0 0.0
        %418 = vmatpush.msra.mxu0 0.0
        %419 = vmatpush.msra.mxu0 0.0
        %420 = vmatpush.msra.mxu0 0.0
        %421 = vmatpush.msra.mxu0 0.0
        %422 = vmatpush.msra.mxu0 0.0
        %423 = vmatpush.msra.mxu0 0.0
        %424 = vmatpush.msra.mxu0 %v400
        %425 = vmatpush.msra.mxu0 %v399
        %426 = vmatpush.msra.mxu0 %v398
        %427 = vmatpush.msra.mxu0 %v397
        %428 = vmatmul.f32.gmra.mxu0 %v407
        %v429 = vpop.f32.mrf.mxu0
        %v430 = vadd.f32 %v403, %v429
        %431 = vmatmul.f32.gmra.mxu0 %v410
        %v432 = vpop.f32.mrf.mxu0
        %v433 = vadd.f32 %v403, %v432
        %434 = vdwg.mxu0
        %v435 = vmax.f32 %v430, 0.0
        %v436 = vmax.f32 %v433, 0.0
        %v437 = vld [vmem:[%s6] sm:$0xff]
        %v438 = vld [vmem:[%s6 + $0x8] sm:$0xff]
        %v439 = vld [vmem:[%s6 + $0x10] sm:$0xff]
        %v440 = vld [vmem:[%s6 + $0x18] sm:$0xff]
        %v441 = vld [vmem:[%s7] sm:$0x1]
        %v443 = vperm.slane %v441, 0
        %v446 = vsel %vm405, %v435, 0
        %v449 = vsel %vm405, %v436, 0
        %451 = vmatpush.msra.mxu0 0.0
        %452 = vmatpush.msra.mxu0 0.0
        %453 = vmatpush.msra.mxu0 0.0
        %454 = vmatpush.msra.mxu0 0.0
        %455 = vmatpush.msra.mxu0 0.0
        %456 = vmatpush.msra.mxu0 0.0
        %457 = vmatpush.msra.mxu0 0.0
        %458 = vmatpush.msra.mxu0 0.0
        %459 = vmatpush.msra.mxu0 0.0
        %460 = vmatpush.msra.mxu0 0.0
        %461 = vmatpush.msra.mxu0 0.0
        %462 = vmatpush.msra.mxu0 0.0
        %463 = vmatpush.msra.mxu0 %v440
        %464 = vmatpush.msra.mxu0 %v439
        %465 = vmatpush.msra.mxu0 %v438
        %466 = vmatpush.msra.mxu0 %v437
        %467 = vmatmul.f32.gmra.mxu0 %v446
        %v468 = vpop.f32.mrf.mxu0
        %v469 = vadd.f32 %v443, %v468
        %470 = vmatmul.f32.gmra.mxu0 %v449
        %v471 = vpop.f32.mrf.mxu0
        %v472 = vadd.f32 %v443, %v471
        %473 = vdwg.mxu0
        %v474 = vmul.f32 %v469, %v472
        %v475 = vsel %vm365, %v474, 0.0
        %476 = vadd.xlane.f32.xlu0 %v475
        %v477 = vpop.xlane.xlu0 %476
        %vm478 = vcmask 7168
        %479 = vst.msk [vmem:[%s356] sm:$0xff] %vm478, %v477
        %p480 = scmp.lt.s32.totalorder %s23, 1
        %s481 = scalar_select %p480, %s23, 1
        %s482 = smul.addr %s481, 8
        %s483 = scalar_lea.vmem %s8, %s482
        // Predicated region
        $region61: #{contrastive_scoring_forward.1} parent=51 // pred_check
          %p484 = pneg %p219
        $region62: #{contrastive_scoring_forward.1} parent=51 // pred_check_branch
          %486 = sbr.rel (%p484) target = $region64
        $region63: #{contrastive_scoring_forward.1} parent=51 // pred_region
          _
        $region64: #{contrastive_scoring_forward.1} parent=51 // pred_fallthru
          _
      $region52: #{contrastive_scoring_forward.1} parent=5 // pred_fallthru
        _
      %p487 = scmp.le.s32.totalorder 2, %s18
      // Predicated region
      $region65: #{contrastive_scoring_forward.1} parent=5 // pred_check
        %p488 = pneg %p487
      $region66: #{contrastive_scoring_forward.1} parent=5 // pred_check_branch
        %490 = sbr.rel (%p488) target = $region68
      $region67: #{contrastive_scoring_forward.1} parent=5 // pred_region
        %s491 = ssub.s32 %s18, 2
        // Predicated region
        $region69: #{contrastive_scoring_forward.1} parent=67 // pred_check
          %p492 = pneg %p225
        $region70: #{contrastive_scoring_forward.1} parent=67 // pred_check_branch
          %494 = sbr.rel (%p492) target = $region72
        $region71: #{contrastive_scoring_forward.1} parent=67 // pred_region
          %p495 = scmp.lt.s32.totalorder %s24, 1
          %s496 = scalar_select %p495, %s24, 1
          %s497 = smul.addr %s496, 8
          %s498 = scalar_lea.vmem %s8, %s497
        $region72: #{contrastive_scoring_forward.1} parent=67 // pred_fallthru
          _
      $region68: #{contrastive_scoring_forward.1} parent=5 // pred_fallthru
        _
    $region6: #{contrastive_scoring_forward.1} parent=1 // loop_footer
      %s22 = sadd.s32 1, %s18
    $region7: #{contrastive_scoring_forward.1} parent=1 // loop_footer_branch
      %17 = sbr.rel target = $region3
    $region8: #{contrastive_scoring_forward.1} parent=1 // loop_exit
      _
    %499 = vsyncpa [#allocation3], 1
    %s500 = scalar_lea.sflag [#allocation3], 1
    %501 = vsyncpa %s500, 1
    %502 = vsyncpa [#allocation5], 1

</llo_original>
